<compile_context>
chip_gen: v6e
topology: v6e:2x2x1
jax: 0.10.0
libtpu: 0.0.40
codegen_flags: <defaults>
</compile_context>

<pallas_src>
import math

import jax
import jax.numpy as jnp
from jax.experimental import pallas as pl
from jax.experimental.pallas import tpu as pltpu


# ----------------------------------------------------------------------------
# Primary path: nn.Identity semantics. No kernel, no copy, no launch overhead.
# ----------------------------------------------------------------------------
def identity(x: jax.Array) -> jax.Array:
    """Identity.forward(x): returns x unchanged (zero cost — no kernel launch)."""
    return x


# ----------------------------------------------------------------------------
# Materializing identity: fresh output buffer via direct HBM->HBM DMA.
# ----------------------------------------------------------------------------
def _make_dma_copy_kernel(n_chunks: int):
    """Kernel that copies the input HBM buffer to the output HBM buffer via DMA."""

    def kernel(x_hbm, o_hbm, sems):
        copies = [
            pltpu.make_async_copy(
                x_hbm if n_chunks == 1 else x_hbm.at[c],
                o_hbm if n_chunks == 1 else o_hbm.at[c],
                sems.at[c],
            )
            for c in range(n_chunks)
        ]
        # Start every slice before waiting so the DMA engine overlaps them.
        for cp in copies:
            cp.start()
        for cp in copies:
            cp.wait()

    return kernel


_CHUNK_THRESHOLD_BYTES = 1 << 20  # only bother slicing copies >= 1 MiB
_MAX_CHUNKS = 4


def identity_copy(x: jax.Array) -> jax.Array:
    """Identity that writes a fresh output buffer (direct HBM->HBM DMA, no VMEM)."""
    total = math.prod(x.shape) if x.shape else 1
    itemsize = jnp.dtype(x.dtype).itemsize
    nbytes = total * itemsize

    if total == 0:
        return x  # nothing to copy

    # Slice large, lane-dense copies into a few chunks so their DMAs overlap.
    # Ragged / small tensors go as one whole-array DMA (no pad, no slice).
    n_chunks = 1
    view = x
    if nbytes >= _CHUNK_THRESHOLD_BYTES:
        for c in (_MAX_CHUNKS, 2):
            if total % (c * 8 * 128) == 0:
                n_chunks = c
                # Free reshape of a contiguous array; lane-dense (…,128) slices.
                view = x.reshape(c, total // (c * 128), 128)
                break

    out = pl.pallas_call(
        _make_dma_copy_kernel(n_chunks),
        out_shape=jax.ShapeDtypeStruct(view.shape, view.dtype),
        in_specs=[pl.BlockSpec(memory_space=pl.ANY)],   # raw HBM ref, no auto-DMA
        out_specs=pl.BlockSpec(memory_space=pl.ANY),    # raw HBM ref, no auto-DMA
        scratch_shapes=[pltpu.SemaphoreType.DMA((n_chunks,))],
        cost_estimate=pl.CostEstimate(
            flops=0,
            transcendentals=0,
            bytes_accessed=2 * nbytes,                  # 1 HBM read + 1 HBM write
        ),
    )(view)

    return out.reshape(x.shape)


if __name__ == "__main__":
    key = jax.random.PRNGKey(0)
    x = jax.random.normal(key, (2, 4, 16, 16), dtype=jnp.float32)

    # Primary identity: pure pass-through (review: no kernel beats any kernel).
    y = identity(x)
    jax.block_until_ready(y)
    assert y.shape == x.shape, f"shape mismatch: {y.shape} vs {x.shape}"
    assert y.dtype == x.dtype, f"dtype mismatch: {y.dtype} vs {x.dtype}"
    assert jnp.array_equal(y, x), "identity output does not match input"

    # Pallas path: fresh buffer via a single whole-array HBM->HBM DMA.
    y2 = identity_copy(x)
    jax.block_until_ready(y2)
    assert y2.shape == x.shape, f"shape mismatch: {y2.shape} vs {x.shape}"
    assert y2.dtype == x.dtype, f"dtype mismatch: {y2.dtype} vs {x.dtype}"
    assert jnp.array_equal(y2, x), "DMA-copy identity output does not match input"

    # Exercise the chunked (overlapped) DMA path on a larger lane-dense tensor.
    big = jax.random.normal(jax.random.PRNGKey(1), (256, 1024), dtype=jnp.float32)
    y3 = identity_copy(big)
    jax.block_until_ready(y3)
    assert y3.shape == big.shape and y3.dtype == big.dtype
    assert jnp.array_equal(y3, big), "chunked DMA-copy output does not match input"

    print("KERNEL_OK")
</pallas_src>

<mosaic_0001>
module attributes {stable_mosaic.version = 11 : i64} {
  func.func @kernel(%arg0: memref<2x4x16x16xf32, #tpu.memory_space<any>>, %arg1: memref<2x4x16x16xf32, #tpu.memory_space<any>>, %arg2: memref<1x!tpu.dma_semaphore, #tpu.memory_space<semaphore_mem>>) attributes {dimension_semantics = [], scalar_prefetch = 0 : i64, scratch_operands = 1 : i64, tpu.core_type = #tpu.core_type<tc>} {
    %c0_i32 = arith.constant 0 : i32
    %0 = tpu.memref_slice %arg2[%c0_i32] : memref<1x!tpu.dma_semaphore, #tpu.memory_space<semaphore_mem>> -> memref<1x!tpu.dma_semaphore, #tpu.memory_space<semaphore_mem>>
    %1 = tpu.memref_squeeze %0 : memref<1x!tpu.dma_semaphore, #tpu.memory_space<semaphore_mem>> -> memref<!tpu.dma_semaphore, #tpu.memory_space<semaphore_mem>>
    tpu.enqueue_dma source(%arg0 : memref<2x4x16x16xf32, #tpu.memory_space<any>>) target(%arg1 : memref<2x4x16x16xf32, #tpu.memory_space<any>>) target_semaphore(%1 : memref<!tpu.dma_semaphore, #tpu.memory_space<semaphore_mem>>)
    %c0_i32_0 = arith.constant 0 : i32
    %2 = tpu.memref_slice %arg2[%c0_i32_0] : memref<1x!tpu.dma_semaphore, #tpu.memory_space<semaphore_mem>> -> memref<1x!tpu.dma_semaphore, #tpu.memory_space<semaphore_mem>>
    %3 = tpu.memref_squeeze %2 : memref<1x!tpu.dma_semaphore, #tpu.memory_space<semaphore_mem>> -> memref<!tpu.dma_semaphore, #tpu.memory_space<semaphore_mem>>
    tpu.wait_dma2 semaphore(%3 : memref<!tpu.dma_semaphore, #tpu.memory_space<semaphore_mem>>) src(%arg0 : memref<2x4x16x16xf32, #tpu.memory_space<any>>) dst(%arg1 : memref<2x4x16x16xf32, #tpu.memory_space<any>>)
    return
  }
}

</mosaic_0001>

<llo_original>
// kernel: tpu_custom_call.1
$region0: #{tpu_custom_call.1}
  #allocation0 [shape = 'u32[]', space=smem, size = 0x4, offset = 0x4, fixed_abs, tag = 'smem constant byte address 0x4 - core index']
  #allocation1 [shape = 'u32[144,128]{1,0:T(1,128)}', space=vmem, size = 0x12000, scoped, tag = 'internal scratch']
  #allocation2 [shape = 's32[1]{0}', space=sflag, size = 0x4, scoped, tag = 'scratch operand']
  #allocation3 [shape = 's32[]', space=sflag, size = 0x4, offset = 0, fixed_abs, tag = 'sflag constant byte address 0x0 - dummy sync flag']
  #allocation4 [shape = 'u32[0]{0}', space=smem, size = 0, offset = 0, fixed_abs, tag = 'smem constant byte address 0x0 - null']
  %s0 = inlined_call_operand.hbm [shape: f32[2,4,16,16], index: 0, kind: input, shape index: {}]
  %s1 = inlined_call_operand.hbm [shape: f32[2,4,16,16], index: 1, kind: output, shape index: {}]
  %s2 = sld [smem:[#allocation0]]
  $region2: #{tpu_custom_call.1} parent=0
    _
  %s4 = ssub.s32 1, %s2
  %s5 = scalar_select 0, %s4, %s2
  %s7 = sshll.u32 1, 14
  %s8 = sxor.u32 4294967295, %s7
  %12 = dma.general %s0, 2048, %s1, [#allocation2], 131072, [#allocation4], 0, 0
  %s13 = smul.u32 2, 4
  %s14 = smul.u32 %s13, 16
  %s15 = smul.u32 %s14, 1
  %s16 = sshll.u32 %s15, 4
  %17 = dma.done [#allocation2], %s16
  %18 = vsyncmov [#allocation2]
  %s19 = vpop.sfrf %18
  %p20 = scmp.eq.s32.totalorder %s19, 0
  %p21 = pneg %p20
  %23 = shalt.err (%p21)

</llo_original>
